<compile_context>
chip_gen: v6e
topology: v6e:2x2x1
jax: 0.10.0
libtpu: 0.0.40
codegen_flags: <defaults>
</compile_context>

<pallas_src>
import functools
import math

import jax
import jax.numpy as jnp
from jax import lax
from jax.experimental import pallas as pl
from jax.experimental.pallas import tpu as pltpu


# ---------------------------------------------------------------------------
# Kernels
# ---------------------------------------------------------------------------

def _fused_kernel(x_ref, o_ref, *, eps, const_scale):
    # Whole sample resident: reduce over everything, then rescale.
    # x_ref is re-read for the store so a second full-size f32 temp does not
    # stay live across the reduction (matters for sub-f32 inputs).
    xf = x_ref[...].astype(jnp.float32)
    ssq = jnp.sum(xf * xf)
    factor = const_scale * lax.rsqrt(ssq + eps)
    o_ref[...] = (x_ref[...].astype(jnp.float32) * factor).astype(o_ref.dtype)


def _chunked_kernel(x_ref, o_ref, ssq_sc, *, eps, const_scale,
                    rows_total, chunk_rows):
    """Single-call chunked path.  grid = (batch, phase, chunk).

    phase 0: accumulate per-sample sum-of-squares into ssq_sc (VMEM scratch,
             persists across grid steps; ragged tail chunk masked).
    phase 1: elementwise rescale of the same lane-dense chunks.
    The output BlockSpec maps every phase-0 step to block (b, 0, 0), so no
    garbage is ever written back to HBM before phase 1 overwrites it.
    """
    p = pl.program_id(1)   # phase
    j = pl.program_id(2)   # chunk index

    @pl.when(jnp.logical_and(p == 0, j == 0))
    def _():
        ssq_sc[...] = jnp.zeros_like(ssq_sc)

    @pl.when(p == 0)
    def _():
        xf = x_ref[...].astype(jnp.float32)
        if rows_total % chunk_rows != 0:
            # Last chunk is ragged: out-of-bounds rows of the block are NOT
            # guaranteed to be zero, so mask them out of the reduction.
            valid = rows_total - j * chunk_rows
            row_ids = lax.broadcasted_iota(jnp.int32, xf.shape, 1)
            xf = jnp.where(row_ids < valid, xf, 0.0)
        ssq_sc[...] += jnp.sum(xf * xf, keepdims=True)

    @pl.when(p == 1)
    def _():
        factor = const_scale * lax.rsqrt(ssq_sc[...] + eps)   # (1, 1, 1)
        o_ref[...] = (x_ref[...].astype(jnp.float32) * factor).astype(o_ref.dtype)


# ---------------------------------------------------------------------------
# VMEM budgeting helpers
# ---------------------------------------------------------------------------

def _physical_vmem_bytes() -> int:
    """Per-core VMEM capacity; generation-aware fallback if query fails."""
    try:
        info = pltpu.get_tpu_info()
        for name in ("vmem_capacity_bytes", "vmem_bytes", "vmem_size_bytes"):
            v = getattr(info, name, None)
            if v:
                return int(v)
    except Exception:
        pass
    # Fallback: only v7x has 64 MiB per TensorCore; v2..v6e have 128 MiB.
    try:
        kind = jax.devices()[0].device_kind.lower()
        if "v7" in kind or "tpu7" in kind:
            return 64 << 20
    except Exception:
        pass
    return 128 << 20


def _block_footprint_bytes(n_elems: int, itemsize: int) -> int:
    # Double-buffered input + double-buffered output + one streamed f32 temp.
    return n_elems * (4 * itemsize + 4)


def _vmem_limit(footprint: int, phys: int) -> int:
    # ~2x headroom over the estimated pipeline footprint, floored at 16 MiB,
    # capped below physical VMEM so Mosaic keeps room for internal scratch.
    return int(min(max(2 * footprint, 16 << 20), phys - (8 << 20)))


# ---------------------------------------------------------------------------
# Wrapper
# ---------------------------------------------------------------------------

def instance_l2_norm(x, *, size_average=True, eps=1e-05, scale=1.0,
                     max_block_bytes=None):
    """Pallas implementation of InstanceL2Norm.forward for NCHW input.

    `max_block_bytes` optionally caps the per-block VMEM footprint (used by
    tests to force the chunked path; production code can ignore it).
    """
    n, c, h, w = x.shape
    m = c * h * w
    itemsize = jnp.dtype(x.dtype).itemsize
    eps = float(eps)
    # Hoist sqrt(C*H*W) to trace time; in-kernel factor is const * rsqrt(ssq+eps).
    const_scale = float(scale) * (math.sqrt(float(m)) if size_average else 1.0)

    phys = _physical_vmem_bytes()
    if phys >= (96 << 20):
        budget = 44 << 20                       # v5e / v6e: 128 MiB physical VMEM
    else:
        budget = min(phys // 3, 24 << 20)       # v7x: 64 MiB physical VMEM
    if max_block_bytes is not None:
        budget = min(budget, int(max_block_bytes))

    fused_footprint = _block_footprint_bytes(m, itemsize)

    # -----------------------------------------------------------------------
    # Path A: whole sample per grid step (2 HBM passes).
    # -----------------------------------------------------------------------
    if fused_footprint <= budget:
        if m % 128 == 0:
            rows, lanes = m // 128, 128   # lane-dense, unmasked stores
        else:
            # No lane-dense factorization exists when C*H*W % 128 != 0.
            # Full-extent block is always legal; (c, h*w) has the largest lane
            # extent, minimizing masked-store waste.  These samples are small
            # and overhead-dominated, so avoid adding pad/slice HBM passes.
            rows, lanes = c, h * w
        x3 = x.reshape(n, rows, lanes)

        kernel = functools.partial(_fused_kernel, eps=eps,
                                   const_scale=const_scale)
        out3 = pl.pallas_call(
            kernel,
            out_shape=jax.ShapeDtypeStruct((n, rows, lanes), x.dtype),
            grid_spec=pltpu.PrefetchScalarGridSpec(
                num_scalar_prefetch=0,
                grid=(n,),
                in_specs=[pl.BlockSpec((1, rows, lanes), lambda i: (i, 0, 0))],
                out_specs=pl.BlockSpec((1, rows, lanes), lambda i: (i, 0, 0)),
            ),
            compiler_params=pltpu.CompilerParams(
                dimension_semantics=("parallel",),
                vmem_limit_bytes=_vmem_limit(fused_footprint, phys),
            ),
            cost_estimate=pl.CostEstimate(
                flops=3 * n * m,
                transcendentals=n,
                bytes_accessed=2 * n * m * itemsize,
            ),
        )(x3)
        return out3.reshape(n, c, h, w)

    # -----------------------------------------------------------------------
    # Path B: chunked single-call two-phase kernel (3 HBM passes).
    # -----------------------------------------------------------------------
    rows_total = (m + 127) // 128
    m_pad = rows_total * 128

    per_row_bytes = _block_footprint_bytes(128, itemsize)   # one (·,128) row
    chunk_rows = (budget // per_row_bytes) // 8 * 8
    chunk_rows = max(512, min(8192, chunk_rows))             # >= 256 KiB blocks
    chunk_rows = min(chunk_rows, rows_total)                 # k=1 => full-extent
    k = -(-rows_total // chunk_rows)

    x_flat = x.reshape(n, m)
    if m_pad != m:
        # Rare (C*H*W not a multiple of 128): pad by at most 127 elements per
        # sample.  Zeros are ssq-neutral; padded lanes are sliced off below.
        x_flat = jnp.pad(x_flat, ((0, 0), (0, m_pad - m)))
    x3 = x_flat.reshape(n, rows_total, 128)

    vlim = _vmem_limit(_block_footprint_bytes(chunk_rows * 128, itemsize), phys)

    kernel = functools.partial(_chunked_kernel, eps=eps,
                               const_scale=const_scale,
                               rows_total=rows_total, chunk_rows=chunk_rows)
    out3 = pl.pallas_call(
        kernel,
        out_shape=jax.ShapeDtypeStruct((n, rows_total, 128), x.dtype),
        grid_spec=pltpu.PrefetchScalarGridSpec(
            num_scalar_prefetch=0,
            grid=(n, 2, k),
            in_specs=[pl.BlockSpec((1, chunk_rows, 128),
                                   lambda b, p, j: (b, j, 0))],
            # Phase 0 pins the output block at (b, 0, 0) (never written back
            # until phase 1 overwrites it); phase 1 streams the real chunks.
            out_specs=pl.BlockSpec((1, chunk_rows, 128),
                                   lambda b, p, j: (b, p * j, 0)),
            scratch_shapes=[pltpu.VMEM((1, 1, 1), jnp.float32)],
        ),
        compiler_params=pltpu.CompilerParams(
            dimension_semantics=("parallel", "arbitrary", "arbitrary"),
            vmem_limit_bytes=vlim,
        ),
        cost_estimate=pl.CostEstimate(
            flops=3 * n * m_pad,
            transcendentals=n * k,
            bytes_accessed=3 * n * m_pad * itemsize,
        ),
    )(x3)

    if m_pad != m:
        return out3.reshape(n, m_pad)[:, :m].reshape(n, c, h, w)
    return out3.reshape(n, c, h, w)


# ---------------------------------------------------------------------------
# Pure-JAX reference mirroring the PyTorch forward.
# ---------------------------------------------------------------------------

def _reference(x, *, size_average=True, eps=1e-05, scale=1.0):
    n, c, h, w = x.shape
    ssq = jnp.sum((x * x).reshape(n, 1, 1, -1), axis=3, keepdims=True)
    if size_average:
        return x * (scale * jnp.sqrt(c * h * w / (ssq + eps)))
    else:
        return x * (scale / jnp.sqrt(ssq + eps))


if __name__ == "__main__":
    key = jax.random.PRNGKey(0)
    k1, k2, k3, k4, k5 = jax.random.split(key, 5)

    # Fused whole-sample path, lane-dense layout (C*H*W % 128 == 0).
    x = jax.random.normal(k1, (2, 4, 16, 16), dtype=jnp.float32)
    out = jax.block_until_ready(instance_l2_norm(x, size_average=True,
                                                 eps=1e-05, scale=1.0))
    ref = _reference(x, size_average=True, eps=1e-05, scale=1.0)
    assert out.shape == x.shape and out.dtype == x.dtype
    assert jnp.allclose(out, ref, atol=1e-5, rtol=1e-5)

    # size_average=False branch.
    out_b = jax.block_until_ready(instance_l2_norm(x, size_average=False))
    ref_b = _reference(x, size_average=False)
    assert jnp.allclose(out_b, ref_b, atol=1e-5, rtol=1e-5)

    # Fused fallback layout when C*H*W is not a multiple of 128.
    x2 = jax.random.normal(k2, (2, 3, 5, 7), dtype=jnp.float32)
    out2 = jax.block_until_ready(instance_l2_norm(x2))
    assert jnp.allclose(out2, _reference(x2), atol=1e-5, rtol=1e-5)

    # Force the chunked path, single-chunk case (k == 1).
    x3 = jax.random.normal(k3, (2, 4, 32, 32), dtype=jnp.float32)
    out3 = jax.block_until_ready(instance_l2_norm(x3, max_block_bytes=2048))
    assert jnp.allclose(out3, _reference(x3), atol=1e-5, rtol=1e-5)

    # Force the chunked path with a ragged tail chunk (masking + partial block).
    x4 = jax.random.normal(k4, (1, 8, 96, 96), dtype=jnp.float32)
    out4 = jax.block_until_ready(instance_l2_norm(x4, max_block_bytes=2048))
    assert jnp.allclose(out4, _reference(x4), atol=1e-5, rtol=1e-4)

    # Force the chunked path with C*H*W not a multiple of 128 (pad/slice branch).
    x5 = jax.random.normal(k5, (1, 3, 50, 50), dtype=jnp.float32)
    out5 = jax.block_until_ready(instance_l2_norm(x5, max_block_bytes=2048))
    assert jnp.allclose(out5, _reference(x5), atol=1e-5, rtol=1e-4)

    print("KERNEL_OK")
</pallas_src>

<mosaic_0001>
module attributes {stable_mosaic.version = 11 : i64} {
  func.func @_fused_kernel(%arg0: i32, %arg1: memref<1x8x128xf32, #tpu.memory_space<vmem>>, %arg2: memref<1x8x128xf32, #tpu.memory_space<vmem>>) attributes {dimension_semantics = [#tpu.dimension_semantics<parallel>], iteration_bounds = array<i64: 2>, scalar_prefetch = 0 : i64, scratch_operands = 0 : i64, tpu.core_type = #tpu.core_type<tc>, window_params = [{transform_indices = @transform_0, window_bounds = array<i64: 1, 8, 128>}, {transform_indices = @transform_1, window_bounds = array<i64: 1, 8, 128>}]} {
    %c0 = arith.constant 0 : index
    %c0_0 = arith.constant 0 : index
    %c0_1 = arith.constant 0 : index
    %0 = vector.load %arg1[%c0, %c0_0, %c0_1] : memref<1x8x128xf32, #tpu.memory_space<vmem>>, vector<1x8x128xf32>
    %1 = arith.mulf %0, %0 : vector<1x8x128xf32>
    %2 = vector.shape_cast %1 : vector<1x8x128xf32> to vector<1x1x8x128xf32>
    %cst = arith.constant dense<0.000000e+00> : vector<1xf32>
    %3 = vector.multi_reduction <add>, %2, %cst [1, 2, 3] : vector<1x1x8x128xf32> to vector<1xf32>
    %4 = vector.shape_cast %3 : vector<1xf32> to vector<1x1x1x1xf32>
    %5 = vector.extract %4[0, 0, 0, 0] : f32 from vector<1x1x1x1xf32>
    %cst_2 = arith.constant 9.99999974E-6 : f32
    %6 = arith.addf %5, %cst_2 : f32
    %7 = math.rsqrt %6 : f32
    %cst_3 = arith.constant 3.200000e+01 : f32
    %8 = arith.mulf %cst_3, %7 : f32
    %c0_4 = arith.constant 0 : index
    %c0_5 = arith.constant 0 : index
    %c0_6 = arith.constant 0 : index
    %9 = vector.load %arg1[%c0_4, %c0_5, %c0_6] : memref<1x8x128xf32, #tpu.memory_space<vmem>>, vector<1x8x128xf32>
    %10 = vector.broadcast %8 : f32 to vector<1x8x128xf32>
    %11 = arith.mulf %9, %10 : vector<1x8x128xf32>
    %c0_7 = arith.constant 0 : index
    %c0_8 = arith.constant 0 : index
    %c0_9 = arith.constant 0 : index
    %12 = vector.load %arg2[%c0_7, %c0_8, %c0_9] : memref<1x8x128xf32, #tpu.memory_space<vmem>>, vector<1x8x128xf32>
    tpu.vector_store %arg2[%c0_7, %c0_8, %c0_9], %11 {strides = array<i32>} : memref<1x8x128xf32, #tpu.memory_space<vmem>>, vector<1x8x128xf32>,
    return
  }
  func.func @transform_0(%arg0: i32) -> (i32, i32, i32) {
    %c0_i32 = arith.constant 0 : i32
    %c0_i32_0 = arith.constant 0 : i32
    %c0_i32_1 = arith.constant 0 : i32
    return %arg0, %c0_i32, %c0_i32_0 : i32, i32, i32
  }
  func.func @transform_1(%arg0: i32) -> (i32, i32, i32) {
    %c0_i32 = arith.constant 0 : i32
    %c0_i32_0 = arith.constant 0 : i32
    %c0_i32_1 = arith.constant 0 : i32
    return %arg0, %c0_i32, %c0_i32_0 : i32, i32, i32
  }
}

</mosaic_0001>

<llo_original>
// kernel: tpu_custom_call.1
$region0: #{tpu_custom_call.1}
  #allocation0 [shape = 'u32[]', space=smem, size = 0x4, offset = 0x4, fixed_abs, tag = 'smem constant byte address 0x4 - core index']
  #allocation1 [shape = 'u32[144,128]{1,0:T(1,128)}', space=vmem, size = 0x12000, scoped, tag = 'internal scratch']
  %s0 = inlined_call_operand.hbm [shape: f32[2,8,128], index: 0, kind: input, shape index: {}]
  %s1 = inlined_call_operand.hbm [shape: f32[2,8,128], index: 1, kind: output, shape index: {}]
  %s2 = sld [smem:[#allocation0]]
  $region41: #{tpu_custom_call.1} parent=0
    _
  %s4 = ssub.s32 1, %s2
  %s5 = scalar_select 0, %s4, %s2
  $region1: #{tpu_custom_call.1} parent=0
    #allocation2 [shape = 'u8[8192]{0}', space=vmem, size = 0x2000, scoped, tag = 'input window, operand 0']
    #allocation3 [shape = 's32[2]{0}', space=sflag, size = 0x8, scoped, tag = 'scoped memory for tpu_custom_call.1']
    #allocation4 [shape = 's32[2]{0}', space=sflag, size = 0x8, scoped, tag = 'scoped memory for tpu_custom_call.1']
    #allocation5 [shape = 'u8[8192]{0}', space=vmem, size = 0x2000, scoped, tag = 'output window, operand 0']
    %6 = vsyncpa [#allocation3], 0
    %s7 = scalar_lea.sflag [#allocation3], 1
    %8 = vsyncpa %s7, 0
    %9 = vsyncpa [#allocation4], 0
    %s10 = scalar_lea.sflag [#allocation4], 1
    %11 = vsyncpa %s10, 0
    loop: start=0, step=1, limit=4
    $region2: #{tpu_custom_call.1} parent=1 // loop_pre_header
      _
    $region3: #{tpu_custom_call.1} parent=1 // loop_header
      %s13 = sphi 0, %s17
      %p14 = scmp.ge.s32.totalorder %s13, 4
      %s23 = sphi 0, %s25
      %s26 = sphi 0, %s23
      %s27 = sphi 0, %s26
      %s43 = sphi 0, %s27
      %s49 = sphi 0, %s51
      %s52 = sphi 0, %s49
      %s53 = sphi 0, %s52
      %s69 = sphi 0, %s53
    $region4: #{tpu_custom_call.1} parent=1 // loop_header_branch
      %16 = sbr.rel (%p14) target = $region8
    $region5: #{tpu_custom_call.1} parent=1 // loop_body
      %s18 = ssub.s32 %s13, 1
      %s19 = ssub.s32 %s13, 2
      %s20 = sadd.s32 %s13, 1
      %s21 = ssub.s32 %s13, %s20
      %p22 = scmp.eq.s32.totalorder %s21, 0
      %s24 = sadd.s32 %s23, 1
      %s25 = scalar_select %p22, %s23, %s24
      %p28 = pneg %p22
      %p29 = scmp.eq.s32.totalorder %s13, 1
      %p30 = por %p28, %p29
      %p31 = scmp.ne.s32.totalorder %s23, %s26
      %p32 = scmp.eq.s32.totalorder %s13, 0
      %p33 = por %p31, %p32
      %p34 = scmp.ne.s32.totalorder %s23, %s26
      %p35 = scmp.eq.s32.totalorder %s18, 1
      %p36 = por %p34, %p35
      %p37 = scmp.ne.s32.totalorder %s26, %s27
      %p38 = scmp.eq.s32.totalorder %s18, 0
      %p39 = por %p37, %p38
      %p40 = scmp.ne.s32.totalorder %s26, %s27
      %p41 = scmp.eq.s32.totalorder %s19, 1
      %p42 = por %p40, %p41
      %p44 = scmp.ne.s32.totalorder %s27, %s43
      %p45 = scmp.eq.s32.totalorder %s19, 0
      %p46 = por %p44, %p45
      %s47 = ssub.s32 %s13, %s20
      %p48 = scmp.eq.s32.totalorder %s47, 0
      %s50 = sadd.s32 %s49, 1
      %s51 = scalar_select %p48, %s49, %s50
      %p54 = pneg %p48
      %p55 = scmp.eq.s32.totalorder %s13, 1
      %p56 = por %p54, %p55
      %p57 = scmp.ne.s32.totalorder %s49, %s52
      %p58 = scmp.eq.s32.totalorder %s13, 0
      %p59 = por %p57, %p58
      %p60 = scmp.ne.s32.totalorder %s49, %s52
      %p61 = scmp.eq.s32.totalorder %s18, 1
      %p62 = por %p60, %p61
      %p63 = scmp.ne.s32.totalorder %s52, %s53
      %p64 = scmp.eq.s32.totalorder %s18, 0
      %p65 = por %p63, %p64
      %p66 = scmp.ne.s32.totalorder %s52, %s53
      %p67 = scmp.eq.s32.totalorder %s19, 1
      %p68 = por %p66, %p67
      %p70 = scmp.ne.s32.totalorder %s53, %s69
      %p71 = scmp.eq.s32.totalorder %s19, 0
      %p72 = por %p70, %p71
      %p73 = scmp.le.s32.totalorder 1, %s13
      %p74 = scmp.lt.s32.totalorder %s13, 3
      %p75 = pnand %p73, %p74
      %p76 = pneg %p75
      // Predicated region
      $region9: #{tpu_custom_call.1} parent=5 // pred_check
        _
      $region10: #{tpu_custom_call.1} parent=5 // pred_check_branch
        %78 = sbr.rel (%p75) target = $region12
      $region11: #{tpu_custom_call.1} parent=5 // pred_region
        %s79 = ssub.s32 %s13, 1
      $region12: #{tpu_custom_call.1} parent=5 // pred_fallthru
        _
      %p80 = scmp.lt.s32.totalorder %s13, 2
      // Predicated region
      $region13: #{tpu_custom_call.1} parent=5 // pred_check
        %p81 = pneg %p80
      $region14: #{tpu_custom_call.1} parent=5 // pred_check_branch
        %83 = sbr.rel (%p81) target = $region16
      $region15: #{tpu_custom_call.1} parent=5 // pred_region
        // Predicated region
        $region17: #{tpu_custom_call.1} parent=15 // pred_check
          %p84 = pneg %p33
        $region18: #{tpu_custom_call.1} parent=15 // pred_check_branch
          %86 = sbr.rel (%p84) target = $region20
        $region19: #{tpu_custom_call.1} parent=15 // pred_region
          %s87 = sand.u32 %s23, 1
          %s88 = scalar_lea.sflag [#allocation3], %s87
          %s89 = sand.u32 %s23, 1
          %s90 = smul.addr %s89, 8
          %s91 = scalar_lea.vmem [#allocation2], %s90
          %s93 = ssub.s32 128, 128
          %94 = vsyncadd %s88, %s93
          %s95 = smul.addr %s13, 128
          %s96 = scalar_lea.hbm %s0, %s95
          %s98 = sshll.u32 %s91, 4
          %s99 = int_to_ptr.vmem [resolvable:$true] %s98
          %101 = dma.hbm_to_vmem [thread:$0]  %s96, 128, %s99, %s88
        $region20: #{tpu_custom_call.1} parent=15 // pred_fallthru
          _
      $region16: #{tpu_custom_call.1} parent=5 // pred_fallthru
        _
      %p102 = scmp.le.s32.totalorder 1, %s13
      %p103 = scmp.lt.s32.totalorder %s13, 3
      %p104 = pnand %p102, %p103
      %p105 = pneg %p104
      // Predicated region
      $region21: #{tpu_custom_call.1} parent=5 // pred_check
        _
      $region22: #{tpu_custom_call.1} parent=5 // pred_check_branch
        %107 = sbr.rel (%p104) target = $region24
      $region23: #{tpu_custom_call.1} parent=5 // pred_region
        %s108 = ssub.s32 %s13, 1
        %s109 = sand.u32 %s26, 1
        %s110 = scalar_lea.sflag [#allocation3], %s109
        %s111 = sand.u32 %s26, 1
        %s112 = smul.addr %s111, 8
        %s113 = scalar_lea.vmem [#allocation2], %s112
        // Predicated region
        $region25: #{tpu_custom_call.1} parent=23 // pred_check
          %p114 = pneg %p39
        $region26: #{tpu_custom_call.1} parent=23 // pred_check_branch
          %116 = sbr.rel (%p114) target = $region28
        $region27: #{tpu_custom_call.1} parent=23 // pred_region
          %117 = dma.done %s110, 128
        $region28: #{tpu_custom_call.1} parent=23 // pred_fallthru
          _
        %s118 = sand.u32 %s26, 1
        %s119 = scalar_lea.sflag [#allocation3], %s118
        %s120 = sand.u32 %s26, 1
        %s121 = smul.addr %s120, 8
        %s122 = scalar_lea.vmem [#allocation2], %s121
        %p123 = pneg %p39
        %p124 = pneg %p36
        %p125 = pneg %p65
        %p126 = pneg %p62
        %s127 = sand.u32 %s52, 1
        %s128 = scalar_lea.sflag [#allocation4], %s127
        %s129 = sand.u32 %s52, 1
        %s130 = smul.addr %s129, 8
        %s131 = scalar_lea.vmem [#allocation5], %s130
        %v132 = vld [vmem:[%s113] sm:$0xff]
        %v133 = vmul.f32 %v132, %v132
        %134 = vadd.xlane.f32.xlu0 %v133
        %v135 = vpop.xlane.xlu0 %134
        %v136 = vrot.slane %v135, 4
        %v137 = vadd.f32 %v135, %v136
        %v138 = vrot.slane %v137, 2
        %v139 = vadd.f32 %v137, %v138
        %v140 = vrot.slane %v139, 1
        %v141 = vadd.f32 %v139, %v140
        %s142 = vtos %v141
        %s143 = sadd.f32 %s142, 1e-05
        %v144 = vstv %s143
        %v145 = vrsqrt.pop %v144
        %s146 = vtos %v145
        %s147 = smul.f32 %s146, 32.0
        %v148 = vstv %s147
        %v149 = vmul.f32 %v132, %v148
        %150 = vst [vmem:[%s131] sm:$0xff] %v149
        %s151 = sand.u32 %s52, 1
        %s152 = scalar_lea.sflag [#allocation4], %s151
        %s153 = sand.u32 %s52, 1
        %s154 = smul.addr %s153, 8
        %s155 = scalar_lea.vmem [#allocation5], %s154
        // Predicated region
        $region29: #{tpu_custom_call.1} parent=23 // pred_check
          %p156 = pneg %p62
        $region30: #{tpu_custom_call.1} parent=23 // pred_check_branch
          %158 = sbr.rel (%p156) target = $region32
        $region31: #{tpu_custom_call.1} parent=23 // pred_region
          %s160 = ssub.s32 128, 128
          %161 = vsyncadd %s152, %s160
          %s162 = smul.addr %s18, 128
          %s163 = scalar_lea.hbm %s1, %s162
          %s165 = sshll.u32 %s155, 4
          %s166 = int_to_ptr.vmem [resolvable:$true] %s165
          %168 = dma.vmem_to_hbm [thread:$0]  %s166, 128, %s163, %s152
        $region32: #{tpu_custom_call.1} parent=23 // pred_fallthru
          _
      $region24: #{tpu_custom_call.1} parent=5 // pred_fallthru
        _
      %p169 = scmp.le.s32.totalorder 2, %s13
      // Predicated region
      $region33: #{tpu_custom_call.1} parent=5 // pred_check
        %p170 = pneg %p169
      $region34: #{tpu_custom_call.1} parent=5 // pred_check_branch
        %172 = sbr.rel (%p170) target = $region36
      $region35: #{tpu_custom_call.1} parent=5 // pred_region
        %s173 = ssub.s32 %s13, 2
        // Predicated region
        $region37: #{tpu_custom_call.1} parent=35 // pred_check
          %p174 = pneg %p68
        $region38: #{tpu_custom_call.1} parent=35 // pred_check_branch
          %176 = sbr.rel (%p174) target = $region40
        $region39: #{tpu_custom_call.1} parent=35 // pred_region
          %s177 = sand.u32 %s53, 1
          %s178 = scalar_lea.sflag [#allocation4], %s177
          %s179 = sand.u32 %s53, 1
          %s180 = smul.addr %s179, 8
          %s181 = scalar_lea.vmem [#allocation5], %s180
          %182 = dma.done %s178, 128
        $region40: #{tpu_custom_call.1} parent=35 // pred_fallthru
          _
      $region36: #{tpu_custom_call.1} parent=5 // pred_fallthru
        _
    $region6: #{tpu_custom_call.1} parent=1 // loop_footer
      %s17 = sadd.s32 1, %s13
    $region7: #{tpu_custom_call.1} parent=1 // loop_footer_branch
      %12 = sbr.rel target = $region3
    $region8: #{tpu_custom_call.1} parent=1 // loop_exit
      _
    %183 = vsyncpa [#allocation3], 1
    %s184 = scalar_lea.sflag [#allocation3], 1
    %185 = vsyncpa %s184, 1
    %186 = vsyncpa [#allocation4], 1
    %s187 = scalar_lea.sflag [#allocation4], 1
    %188 = vsyncpa %s187, 1

</llo_original>
